<compile_context>
chip_gen: v7x
topology: tpu7x:2x2x1
jax: 0.10.0
libtpu: 0.0.40
codegen_flags: <defaults>
</compile_context>

<pallas_src>
import jax
import jax.numpy as jnp
from jax.experimental import pallas as pl
from jax.experimental.pallas import tpu as pltpu


# ------------------------------ Pallas kernel ------------------------------- #

def _make_fused_kernel(tm, with_dropout):
    """Fused 2-phase GCN kernel over grid (phase, row_tile).

    phase 0: h[rows] = dropout(relu(adj[rows, :] @ W1 + b1))  -> VMEM scratch
    phase 1: out[rows] = (adj[rows, :] @ h) @ W2 + b2         -> HBM output
    """

    def body(adj_ref, w1_ref, b1_ref, w2_ref, b2_ref, o_ref, h_ref, drop_ref):
        phase = pl.program_id(0)
        row0 = pl.multiple_of(pl.program_id(1) * tm, tm)
        adj_tile = adj_ref[pl.ds(row0, tm), :]          # (tm, N) bf16, from VMEM

        @pl.when(phase == 0)
        def _():
            # Layer 1 (x = I):  h = relu(adj @ W1 + b1)  [* dropout scale]
            h = jnp.dot(adj_tile, w1_ref[...],
                        preferred_element_type=jnp.float32)
            h = jnp.maximum(h + b1_ref[...], 0.0)       # f32 epilogue
            if drop_ref is not None:
                h = h * drop_ref[...]                   # keep-mask / (1 - p)
            h_ref[pl.ds(row0, tm), :] = h.astype(h_ref.dtype)

        @pl.when(phase == 1)
        def _():
            # Layer 2:  out = (adj @ h) @ W2 + b2   (== adj @ (h @ W2) + b2)
            t = jnp.dot(adj_tile, h_ref[...],
                        preferred_element_type=jnp.float32)
            out = jnp.dot(t.astype(w2_ref.dtype), w2_ref[...],
                          preferred_element_type=jnp.float32) + b2_ref[...]
            o_ref[...] = out.astype(o_ref.dtype)

    if with_dropout:
        def kernel(adj_ref, w1_ref, b1_ref, w2_ref, b2_ref, drop_ref, o_ref,
                   h_ref):
            body(adj_ref, w1_ref, b1_ref, w2_ref, b2_ref, o_ref, h_ref,
                 drop_ref)
    else:
        def kernel(adj_ref, w1_ref, b1_ref, w2_ref, b2_ref, o_ref, h_ref):
            body(adj_ref, w1_ref, b1_ref, w2_ref, b2_ref, o_ref, h_ref, None)
    return kernel


# ------------------------------ helpers / model ----------------------------- #

def _pick_row_tile(n):
    """Largest multiple-of-8 row tile <= 256 dividing n, preferring >= 2 grid
    steps so the row loop actually pipelines."""
    for t in (256, 128, 64, 32, 16, 8):
        if t <= n and n % t == 0 and n // t >= 2:
            return t
    for t in (256, 128, 64, 32, 16, 8):
        if t <= n and n % t == 0:
            return t
    return n   # fallback: single full-row tile (n not a multiple of 8)


class GCN:
    def __init__(self, item_count, embedding_size, adj_matrix, dropout_rate,
                 key=None):
        self.item_count = int(item_count)
        self.embedding_size = int(embedding_size)
        self.dropout_rate = float(dropout_rate)
        if key is None:
            key = jax.random.PRNGKey(0)
        N, E = self.item_count, self.embedding_size

        # normalize(adj + I): row-normalize, exactly as the PyTorch module.
        adj = jnp.asarray(adj_matrix, jnp.float32) + jnp.eye(N, dtype=jnp.float32)
        rowsum = jnp.sum(adj, axis=1, keepdims=True)
        r_inv = jnp.where(rowsum == 0.0, 0.0, 1.0 / rowsum)
        # bf16 storage for the dominant MXU operands; biases stay f32 for the
        # f32 epilogue (accumulation is always f32 via preferred_element_type).
        self.adj = (r_inv * adj).astype(jnp.bfloat16)            # (N, N)

        # GraphConvolution params: uniform(-stdv, stdv), stdv = 1/sqrt(out).
        k1, k2, k3, k4 = jax.random.split(key, 4)
        stdv = 1.0 / (E ** 0.5)
        self.w1 = jax.random.uniform(k1, (N, E), jnp.float32,
                                     -stdv, stdv).astype(jnp.bfloat16)
        self.b1 = jax.random.uniform(k2, (1, E), jnp.float32, -stdv, stdv)
        self.w2 = jax.random.uniform(k3, (E, E), jnp.float32,
                                     -stdv, stdv).astype(jnp.bfloat16)
        self.b2 = jax.random.uniform(k4, (1, E), jnp.float32, -stdv, stdv)

        self._tm = _pick_row_tile(N)

    def __call__(self, training=False, dropout_key=None):
        N, E, tm = self.item_count, self.embedding_size, self._tm
        num_tiles = N // tm
        grid = (2, num_tiles)                       # (phase, row tile)

        # Resident (constant index_map) inputs: DMA'd from HBM exactly once.
        adj_spec = pl.BlockSpec((N, N), lambda p, i: (0, 0))
        w1_spec = pl.BlockSpec((N, E), lambda p, i: (0, 0))
        b1_spec = pl.BlockSpec((1, E), lambda p, i: (0, 0))
        w2_spec = pl.BlockSpec((E, E), lambda p, i: (0, 0))
        b2_spec = pl.BlockSpec((1, E), lambda p, i: (0, 0))
        # Output is written only in phase 1; pinning the block index at 0 while
        # p == 0 means no unwritten buffer is ever flushed back to HBM.
        out_spec = pl.BlockSpec((tm, E), lambda p, i: (i * p, 0))

        in_specs = [adj_spec, w1_spec, b1_spec, w2_spec, b2_spec]
        args = [self.adj, self.w1, self.b1, self.w2, self.b2]

        use_dropout = bool(training) and self.dropout_rate > 0.0
        if use_dropout:
            if dropout_key is None:
                dropout_key = jax.random.PRNGKey(0)
            rate = self.dropout_rate
            # nn.Dropout training semantics: Bernoulli keep, scale by 1/(1-p).
            keep = jax.random.bernoulli(dropout_key, 1.0 - rate, (N, E))
            scale = 0.0 if rate >= 1.0 else 1.0 / (1.0 - rate)
            drop = jnp.where(keep, scale, 0.0).astype(jnp.float32)
            # Only consumed in phase 0; pin the index during phase 1.
            in_specs.append(pl.BlockSpec((tm, E), lambda p, i: (i * (1 - p), 0)))
            args.append(drop)

        kernel = _make_fused_kernel(tm, use_dropout)

        # VMEM working set: resident bf16 adj/W1/W2 + bf16 h scratch + small
        # per-tile output / dropout buffers (double-buffered). 2x margin.
        resident = (N * N + N * E + E * E + N * E) * 2 + 2 * E * 4
        tiles = 2 * (2 * tm * E * 4)
        vmem_limit = int(min(64 * 1024 * 1024,
                             max(16 * 1024 * 1024,
                                 2 * resident + tiles + (1 << 20))))

        return pl.pallas_call(
            kernel,
            out_shape=jax.ShapeDtypeStruct((N, E), jnp.float32),
            grid=grid,
            in_specs=in_specs,
            out_specs=out_spec,
            scratch_shapes=[pltpu.VMEM((N, E), jnp.bfloat16)],  # h, never in HBM
            compiler_params=pltpu.CompilerParams(
                # Phase 1 depends on every phase-0 row tile through the shared
                # VMEM scratch, so both axes must run in order on one core.
                dimension_semantics=("arbitrary", "arbitrary"),
                vmem_limit_bytes=vmem_limit),
        )(*args)


# ---------------------------------- main ------------------------------------ #

if __name__ == "__main__":
    key = jax.random.PRNGKey(0)
    k_adj, k_params, k_drop = jax.random.split(key, 3)

    item_count = 64
    embedding_size = 128
    dropout_rate = 0.5

    # Random undirected adjacency (no self-loops; the module adds I itself).
    a = jax.random.bernoulli(k_adj, 0.1, (item_count, item_count))
    a = jnp.logical_or(a, a.T).astype(jnp.float32)
    a = a * (1.0 - jnp.eye(item_count, dtype=jnp.float32))

    gcn = GCN(item_count, embedding_size, a, dropout_rate, key=k_params)

    # ---- eval-mode forward (dropout = identity): check vs pure-JAX reference.
    out = jax.block_until_ready(gcn(training=False))
    assert out.shape == (item_count, embedding_size), out.shape

    # Reference mirroring the kernel numerics (bf16 operands, f32 accumulation,
    # bf16 h / intermediate) so the check isolates the Pallas plumbing.
    ref_h = jnp.maximum(
        jnp.dot(gcn.adj, gcn.w1, preferred_element_type=jnp.float32) + gcn.b1,
        0.0)
    ref_t = jnp.dot(gcn.adj, ref_h.astype(jnp.bfloat16),
                    preferred_element_type=jnp.float32)
    ref = jnp.dot(ref_t.astype(jnp.bfloat16), gcn.w2,
                  preferred_element_type=jnp.float32) + gcn.b2
    err = float(jnp.max(jnp.abs(out - ref)))
    assert jnp.allclose(out, ref, rtol=5e-3, atol=5e-3), err

    # Looser sanity check against the full-f32 module semantics.
    adj_f = gcn.adj.astype(jnp.float32)
    w1_f = gcn.w1.astype(jnp.float32)
    w2_f = gcn.w2.astype(jnp.float32)
    ref32_h = jnp.maximum(adj_f @ w1_f + gcn.b1, 0.0)
    ref32 = adj_f @ (ref32_h @ w2_f) + gcn.b2
    assert jnp.allclose(out, ref32, rtol=5e-2, atol=5e-2), \
        float(jnp.max(jnp.abs(out - ref32)))

    # ---- training-mode forward (fused dropout-mask epilogue): smoke test.
    out_tr = jax.block_until_ready(gcn(training=True, dropout_key=k_drop))
    assert out_tr.shape == (item_count, embedding_size), out_tr.shape
    assert bool(jnp.all(jnp.isfinite(out_tr)))

    print("KERNEL_OK")
</pallas_src>

<mosaic_0001>
module attributes {stable_mosaic.version = 11 : i64} {
  func.func @kernel(%arg0: i32, %arg1: i32, %arg2: memref<64x64xbf16, #tpu.memory_space<vmem>>, %arg3: memref<64x128xbf16, #tpu.memory_space<vmem>>, %arg4: memref<1x128xf32, #tpu.memory_space<vmem>>, %arg5: memref<128x128xbf16, #tpu.memory_space<vmem>>, %arg6: memref<1x128xf32, #tpu.memory_space<vmem>>, %arg7: memref<32x128xf32, #tpu.memory_space<vmem>>, %arg8: memref<64x128xbf16, #tpu.memory_space<vmem>>) attributes {dimension_semantics = [#tpu.dimension_semantics<arbitrary>, #tpu.dimension_semantics<arbitrary>], iteration_bounds = array<i64: 2, 2>, scalar_prefetch = 0 : i64, scratch_operands = 1 : i64, tpu.core_type = #tpu.core_type<tc>, window_params = [{pipeline_mode = #tpu.pipeline_mode<synchronous>, transform_indices = @transform_0, window_bounds = array<i64: 64, 64>}, {pipeline_mode = #tpu.pipeline_mode<synchronous>, transform_indices = @transform_1, window_bounds = array<i64: 64, 128>}, {pipeline_mode = #tpu.pipeline_mode<synchronous>, transform_indices = @transform_2, window_bounds = array<i64: 1, 128>}, {pipeline_mode = #tpu.pipeline_mode<synchronous>, transform_indices = @transform_3, window_bounds = array<i64: 128, 128>}, {pipeline_mode = #tpu.pipeline_mode<synchronous>, transform_indices = @transform_4, window_bounds = array<i64: 1, 128>}, {transform_indices = @transform_5, window_bounds = array<i64: 32, 128>}]} {
    %c32_i32 = arith.constant 32 : i32
    %0 = arith.muli %arg1, %c32_i32 : i32
    %1 = tpu.assume_multiple %0, 32 : i32
    %2 = arith.index_cast %1 : i32 to index
    %c0 = arith.constant 0 : index
    %3 = vector.load %arg2[%2, %c0] : memref<64x64xbf16, #tpu.memory_space<vmem>>, vector<32x64xbf16>
    %c0_i32 = arith.constant 0 : i32
    %4 = arith.cmpi eq, %arg0, %c0_i32 : i32
    %5 = arith.extui %4 : i1 to i32
    %c0_i32_0 = arith.constant 0 : i32
    %6 = arith.cmpi ne, %5, %c0_i32_0 : i32
    scf.if %6 {
      %c0_2 = arith.constant 0 : index
      %c0_3 = arith.constant 0 : index
      %10 = vector.load %arg3[%c0_2, %c0_3] : memref<64x128xbf16, #tpu.memory_space<vmem>>, vector<64x128xbf16>
      %cst = arith.constant dense<0.000000e+00> : vector<32x128xf32>
      %11 = tpu.matmul %3, %10, %cst {dimension_numbers = #tpu.dot_dimension_numbers<[1], [0], [0], [1], [0, 0, 1, 1], [], []>} : vector<32x64xbf16>, vector<64x128xbf16>, vector<32x128xf32> -> vector<32x128xf32>
      %c0_4 = arith.constant 0 : index
      %c0_5 = arith.constant 0 : index
      %12 = vector.load %arg4[%c0_4, %c0_5] : memref<1x128xf32, #tpu.memory_space<vmem>>, vector<1x128xf32>
      %13 = vector.broadcast %12 : vector<1x128xf32> to vector<32x128xf32>
      %14 = arith.addf %11, %13 : vector<32x128xf32>
      %cst_6 = arith.constant 0.000000e+00 : f32
      %15 = vector.broadcast %cst_6 : f32 to vector<32x128xf32>
      %16 = arith.maximumf %14, %15 : vector<32x128xf32>
      %17 = arith.truncf %16 : vector<32x128xf32> to vector<32x128xbf16>
      %18 = arith.index_cast %1 : i32 to index
      %c0_7 = arith.constant 0 : index
      %19 = vector.load %arg8[%18, %c0_7] : memref<64x128xbf16, #tpu.memory_space<vmem>>, vector<32x128xbf16>
      tpu.vector_store %arg8[%18, %c0_7], %17 {strides = array<i32>} : memref<64x128xbf16, #tpu.memory_space<vmem>>, vector<32x128xbf16>,
    } else {
    }
    %c1_i32 = arith.constant 1 : i32
    %7 = arith.cmpi eq, %arg0, %c1_i32 : i32
    %8 = arith.extui %7 : i1 to i32
    %c0_i32_1 = arith.constant 0 : i32
    %9 = arith.cmpi ne, %8, %c0_i32_1 : i32
    scf.if %9 {
      %c0_2 = arith.constant 0 : index
      %c0_3 = arith.constant 0 : index
      %10 = vector.load %arg8[%c0_2, %c0_3] : memref<64x128xbf16, #tpu.memory_space<vmem>>, vector<64x128xbf16>
      %cst = arith.constant dense<0.000000e+00> : vector<32x128xf32>
      %11 = tpu.matmul %3, %10, %cst {dimension_numbers = #tpu.dot_dimension_numbers<[1], [0], [0], [1], [0, 0, 1, 1], [], []>} : vector<32x64xbf16>, vector<64x128xbf16>, vector<32x128xf32> -> vector<32x128xf32>
      %12 = arith.truncf %11 : vector<32x128xf32> to vector<32x128xbf16>
      %c0_4 = arith.constant 0 : index
      %c0_5 = arith.constant 0 : index
      %13 = vector.load %arg5[%c0_4, %c0_5] : memref<128x128xbf16, #tpu.memory_space<vmem>>, vector<128x128xbf16>
      %cst_6 = arith.constant dense<0.000000e+00> : vector<32x128xf32>
      %14 = tpu.matmul %12, %13, %cst_6 {dimension_numbers = #tpu.dot_dimension_numbers<[1], [0], [0], [1], [0, 0, 1, 1], [], []>} : vector<32x128xbf16>, vector<128x128xbf16>, vector<32x128xf32> -> vector<32x128xf32>
      %c0_7 = arith.constant 0 : index
      %c0_8 = arith.constant 0 : index
      %15 = vector.load %arg6[%c0_7, %c0_8] : memref<1x128xf32, #tpu.memory_space<vmem>>, vector<1x128xf32>
      %16 = vector.broadcast %15 : vector<1x128xf32> to vector<32x128xf32>
      %17 = arith.addf %14, %16 : vector<32x128xf32>
      %c0_9 = arith.constant 0 : index
      %c0_10 = arith.constant 0 : index
      %18 = vector.load %arg7[%c0_9, %c0_10] : memref<32x128xf32, #tpu.memory_space<vmem>>, vector<32x128xf32>
      tpu.vector_store %arg7[%c0_9, %c0_10], %17 {strides = array<i32>} : memref<32x128xf32, #tpu.memory_space<vmem>>, vector<32x128xf32>,
    } else {
    }
    return
  }
  func.func @transform_0(%arg0: i32, %arg1: i32) -> (i32, i32) {
    %c0_i32 = arith.constant 0 : i32
    %c0_i32_0 = arith.constant 0 : i32
    %c0_i32_1 = arith.constant 0 : i32
    return %c0_i32, %c0_i32_0 : i32, i32
  }
  func.func @transform_1(%arg0: i32, %arg1: i32) -> (i32, i32) {
    %c0_i32 = arith.constant 0 : i32
    %c0_i32_0 = arith.constant 0 : i32
    %c0_i32_1 = arith.constant 0 : i32
    return %c0_i32, %c0_i32_0 : i32, i32
  }
  func.func @transform_2(%arg0: i32, %arg1: i32) -> (i32, i32) {
    %c0_i32 = arith.constant 0 : i32
    %c0_i32_0 = arith.constant 0 : i32
    %c0_i32_1 = arith.constant 0 : i32
    return %c0_i32, %c0_i32_0 : i32, i32
  }
  func.func @transform_3(%arg0: i32, %arg1: i32) -> (i32, i32) {
    %c0_i32 = arith.constant 0 : i32
    %c0_i32_0 = arith.constant 0 : i32
    %c0_i32_1 = arith.constant 0 : i32
    return %c0_i32, %c0_i32_0 : i32, i32
  }
  func.func @transform_4(%arg0: i32, %arg1: i32) -> (i32, i32) {
    %c0_i32 = arith.constant 0 : i32
    %c0_i32_0 = arith.constant 0 : i32
    %c0_i32_1 = arith.constant 0 : i32
    return %c0_i32, %c0_i32_0 : i32, i32
  }
  func.func @transform_5(%arg0: i32, %arg1: i32) -> (i32, i32) {
    %0 = arith.muli %arg1, %arg0 : i32
    %c0_i32 = arith.constant 0 : i32
    %c0_i32_0 = arith.constant 0 : i32
    return %0, %c0_i32 : i32, i32
  }
}

</mosaic_0001>

<llo_original>
// kernel: tpu_custom_call.1
$region0: #{tpu_custom_call.1}
  #allocation0 [shape = 'u32[]', space=smem, size = 0x4, offset = 0x4, fixed_abs, tag = 'smem constant byte address 0x4 - core index']
  #allocation1 [shape = 'u32[144,128]{1,0:T(1,128)}', space=vmem, size = 0x12000, scoped, tag = 'internal scratch']
  #allocation2 [shape = 'bf16[64,128]{1,0:T(16,128)(2,1)}', space=vmem, size = 0x4000, scoped, tag = 'scratch operand']
  %s0 = inlined_call_operand.hbm [shape: bf16[64,64], index: 0, kind: input, shape index: {}]
  %s1 = inlined_call_operand.hbm [shape: bf16[64,128], index: 1, kind: input, shape index: {}]
  %s2 = inlined_call_operand.vmem [shape: f32[1,128], index: 2, kind: input, shape index: {}]
  %s3 = inlined_call_operand.hbm [shape: bf16[128,128], index: 3, kind: input, shape index: {}]
  %s4 = inlined_call_operand.vmem [shape: f32[1,128], index: 4, kind: input, shape index: {}]
  %s5 = inlined_call_operand.hbm [shape: f32[64,128], index: 5, kind: output, shape index: {}]
  %s6 = sld [smem:[#allocation0]]
  $region73: #{tpu_custom_call.1} parent=0
    _
  %s8 = ssub.s32 1, %s6
  %s9 = scalar_select 0, %s8, %s6
  $region1: #{tpu_custom_call.1} parent=0
    #allocation3 [shape = 'u8[16384]{0}', space=vmem, size = 0x4000, scoped, tag = 'input window, operand 0, single buffered']
    #allocation4 [shape = 's32[2]{0}', space=sflag, size = 0x8, scoped, tag = 'scoped memory for tpu_custom_call.1']
    #allocation5 [shape = 's32[2]{0}', space=sflag, size = 0x8, scoped, tag = 'scoped memory for tpu_custom_call.1']
    #allocation6 [shape = 'u8[16384]{0}', space=vmem, size = 0x4000, scoped, tag = 'input window, operand 1, single buffered']
    #allocation7 [shape = 's32[1]{0}', space=sflag, size = 0x4, scoped, tag = 'scoped memory for tpu_custom_call.1']
    #allocation8 [shape = 'u8[32768]{0}', space=vmem, size = 0x8000, scoped, tag = 'input window, operand 3, single buffered']
    #allocation9 [shape = 'u8[32768]{0}', space=vmem, size = 0x8000, scoped, tag = 'output window, operand 0']
    %10 = vsyncpa [#allocation4], 0
    %11 = vsyncpa [#allocation7], 0
    %12 = vsyncpa [#allocation5], 0
    %s13 = scalar_lea.sflag [#allocation5], 1
    %14 = vsyncpa %s13, 0
    loop: start=0, step=1, limit=6
    $region2: #{tpu_custom_call.1} parent=1 // loop_pre_header
      _
    $region3: #{tpu_custom_call.1} parent=1 // loop_header
      %s16 = sphi 0, %s20
      %p17 = scmp.ge.s32.totalorder %s16, 6
      %s23 = sphi 0, %s35
      %s24 = sphi 0, %s31
      %s25 = sphi 0, %s23
      %s26 = sphi 0, %s24
      %s27 = sphi 0, %s25
      %s28 = sphi 0, %s26
      %s36 = sphi 0, %s36
      %s38 = sphi 0, %s36
      %s39 = sphi 0, %s38
      %s53 = sphi 0, %s39
      %s57 = sphi 0, %s57
      %s59 = sphi 0, %s57
      %s60 = sphi 0, %s59
      %s74 = sphi 0, %s60
      %s78 = sphi 0, %s78
      %s80 = sphi 0, %s78
      %s81 = sphi 0, %s80
      %s95 = sphi 0, %s81
      %s99 = sphi 0, %s99
      %s101 = sphi 0, %s99
      %s102 = sphi 0, %s101
      %s116 = sphi 0, %s102
      %s120 = sphi 0, %s120
      %s122 = sphi 0, %s120
      %s123 = sphi 0, %s122
      %s137 = sphi 0, %s123
      %s145 = sphi 0, %s147
      %s148 = sphi 0, %s145
      %s149 = sphi 0, %s148
      %s165 = sphi 0, %s149
    $region4: #{tpu_custom_call.1} parent=1 // loop_header_branch
      %19 = sbr.rel (%p17) target = $region8
    $region5: #{tpu_custom_call.1} parent=1 // loop_body
      %s21 = ssub.s32 %s16, 1
      %s22 = ssub.s32 %s16, 2
      %s29 = sadd.s32 1, %s24
      %p30 = scmp.ge.s32.totalorder %s29, 2
      %s31 = scalar_select %p30, 0, %s29
      %s32 = sadd.s32 1, %s23
      %s33 = scalar_select %p30, %s32, %s23
      %p34 = scmp.ge.s32.totalorder %s33, 2
      %s35 = scalar_select %p34, 0, %s33
      %s37 = sadd.s32 %s36, 1
      %p40 = scmp.eq.s32.totalorder %s16, 3
      %p41 = scmp.ne.s32.totalorder %s36, %s38
      %p42 = scmp.eq.s32.totalorder %s16, 0
      %p43 = por %p41, %p42
      %p44 = scmp.ne.s32.totalorder %s36, %s38
      %p45 = scmp.eq.s32.totalorder %s21, 3
      %p46 = por %p44, %p45
      %p47 = scmp.ne.s32.totalorder %s38, %s39
      %p48 = scmp.eq.s32.totalorder %s21, 0
      %p49 = por %p47, %p48
      %p50 = scmp.ne.s32.totalorder %s38, %s39
      %p51 = scmp.eq.s32.totalorder %s22, 3
      %p52 = por %p50, %p51
      %p54 = scmp.ne.s32.totalorder %s39, %s53
      %p55 = scmp.eq.s32.totalorder %s22, 0
      %p56 = por %p54, %p55
      %s58 = sadd.s32 %s57, 1
      %p61 = scmp.eq.s32.totalorder %s16, 3
      %p62 = scmp.ne.s32.totalorder %s57, %s59
      %p63 = scmp.eq.s32.totalorder %s16, 0
      %p64 = por %p62, %p63
      %p65 = scmp.ne.s32.totalorder %s57, %s59
      %p66 = scmp.eq.s32.totalorder %s21, 3
      %p67 = por %p65, %p66
      %p68 = scmp.ne.s32.totalorder %s59, %s60
      %p69 = scmp.eq.s32.totalorder %s21, 0
      %p70 = por %p68, %p69
      %p71 = scmp.ne.s32.totalorder %s59, %s60
      %p72 = scmp.eq.s32.totalorder %s22, 3
      %p73 = por %p71, %p72
      %p75 = scmp.ne.s32.totalorder %s60, %s74
      %p76 = scmp.eq.s32.totalorder %s22, 0
      %p77 = por %p75, %p76
      %s79 = sadd.s32 %s78, 1
      %p82 = scmp.eq.s32.totalorder %s16, 3
      %p83 = scmp.ne.s32.totalorder %s78, %s80
      %p84 = scmp.eq.s32.totalorder %s16, 0
      %p85 = por %p83, %p84
      %p86 = scmp.ne.s32.totalorder %s78, %s80
      %p87 = scmp.eq.s32.totalorder %s21, 3
      %p88 = por %p86, %p87
      %p89 = scmp.ne.s32.totalorder %s80, %s81
      %p90 = scmp.eq.s32.totalorder %s21, 0
      %p91 = por %p89, %p90
      %p92 = scmp.ne.s32.totalorder %s80, %s81
      %p93 = scmp.eq.s32.totalorder %s22, 3
      %p94 = por %p92, %p93
      %p96 = scmp.ne.s32.totalorder %s81, %s95
      %p97 = scmp.eq.s32.totalorder %s22, 0
      %p98 = por %p96, %p97
      %s100 = sadd.s32 %s99, 1
      %p103 = scmp.eq.s32.totalorder %s16, 3
      %p104 = scmp.ne.s32.totalorder %s99, %s101
      %p105 = scmp.eq.s32.totalorder %s16, 0
      %p106 = por %p104, %p105
      %p107 = scmp.ne.s32.totalorder %s99, %s101
      %p108 = scmp.eq.s32.totalorder %s21, 3
      %p109 = por %p107, %p108
      %p110 = scmp.ne.s32.totalorder %s101, %s102
      %p111 = scmp.eq.s32.totalorder %s21, 0
      %p112 = por %p110, %p111
      %p113 = scmp.ne.s32.totalorder %s101, %s102
      %p114 = scmp.eq.s32.totalorder %s22, 3
      %p115 = por %p113, %p114
      %p117 = scmp.ne.s32.totalorder %s102, %s116
      %p118 = scmp.eq.s32.totalorder %s22, 0
      %p119 = por %p117, %p118
      %s121 = sadd.s32 %s120, 1
      %p124 = scmp.eq.s32.totalorder %s16, 3
      %p125 = scmp.ne.s32.totalorder %s120, %s122
      %p126 = scmp.eq.s32.totalorder %s16, 0
      %p127 = por %p125, %p126
      %p128 = scmp.ne.s32.totalorder %s120, %s122
      %p129 = scmp.eq.s32.totalorder %s21, 3
      %p130 = por %p128, %p129
      %p131 = scmp.ne.s32.totalorder %s122, %s123
      %p132 = scmp.eq.s32.totalorder %s21, 0
      %p133 = por %p131, %p132
      %p134 = scmp.ne.s32.totalorder %s122, %s123
      %p135 = scmp.eq.s32.totalorder %s22, 3
      %p136 = por %p134, %p135
      %p138 = scmp.ne.s32.totalorder %s123, %s137
      %p139 = scmp.eq.s32.totalorder %s22, 0
      %p140 = por %p138, %p139
      %s141 = smul.u32 %s24, %s23
      %s142 = smul.u32 %s31, %s35
      %s143 = ssub.s32 %s141, %s142
      %p144 = scmp.eq.s32.totalorder %s143, 0
      %s146 = sadd.s32 %s145, 1
      %s147 = scalar_select %p144, %s145, %s146
      %p150 = pneg %p144
      %p151 = scmp.eq.s32.totalorder %s16, 3
      %p152 = por %p150, %p151
      %p153 = scmp.ne.s32.totalorder %s145, %s148
      %p154 = scmp.eq.s32.totalorder %s16, 0
      %p155 = por %p153, %p154
      %p156 = scmp.ne.s32.totalorder %s145, %s148
      %p157 = scmp.eq.s32.totalorder %s21, 3
      %p158 = por %p156, %p157
      %p159 = scmp.ne.s32.totalorder %s148, %s149
      %p160 = scmp.eq.s32.totalorder %s21, 0
      %p161 = por %p159, %p160
      %p162 = scmp.ne.s32.totalorder %s148, %s149
      %p163 = scmp.eq.s32.totalorder %s22, 3
      %p164 = por %p162, %p163
      %p166 = scmp.ne.s32.totalorder %s149, %s165
      %p167 = scmp.eq.s32.totalorder %s22, 0
      %p168 = por %p166, %p167
      %p169 = scmp.le.s32.totalorder 1, %s16
      %p170 = scmp.lt.s32.totalorder %s16, 5
      %p171 = pnand %p169, %p170
      %p172 = pneg %p171
      // Predicated region
      $region9: #{tpu_custom_call.1} parent=5 // pred_check
        _
      $region10: #{tpu_custom_call.1} parent=5 // pred_check_branch
        %174 = sbr.rel (%p171) target = $region12
      $region11: #{tpu_custom_call.1} parent=5 // pred_region
        %s175 = ssub.s32 %s16, 1
        // Predicated region
        $region13: #{tpu_custom_call.1} parent=11 // pred_check
          %p176 = pneg %p49
        $region14: #{tpu_custom_call.1} parent=11 // pred_check_branch
          %178 = sbr.rel (%p176) target = $region16
        $region15: #{tpu_custom_call.1} parent=11 // pred_region
          %s180 = ssub.s32 512, 512
          %181 = vsyncadd [#allocation4], %s180
          %s182 = sshll.u32 [#allocation3], 4
          %s183 = int_to_ptr.vmem [resolvable:$true] %s182
          %188 = dma.hbm_to_vmem [thread:$0]  %s0, 512, %s183, [#allocation4], 64, 64, 4
        $region16: #{tpu_custom_call.1} parent=11 // pred_fallthru
          _
        // Predicated region
        $region17: #{tpu_custom_call.1} parent=11 // pred_check
          %p189 = pneg %p70
        $region18: #{tpu_custom_call.1} parent=11 // pred_check_branch
          %191 = sbr.rel (%p189) target = $region20
        $region19: #{tpu_custom_call.1} parent=11 // pred_region
          %s193 = ssub.s32 512, 512
          %194 = vsyncadd [#allocation7], %s193
          %s195 = sshll.u32 [#allocation6], 4
          %s196 = int_to_ptr.vmem [resolvable:$true] %s195
          %201 = dma.hbm_to_vmem [thread:$0]  %s1, 512, %s196, [#allocation7], 64, 64, 4
        $region20: #{tpu_custom_call.1} parent=11 // pred_fallthru
          _
        // Predicated region
        $region21: #{tpu_custom_call.1} parent=11 // pred_check
          %p202 = pneg %p91
        $region22: #{tpu_custom_call.1} parent=11 // pred_check_branch
          %204 = sbr.rel (%p202) target = $region24
        $region23: #{tpu_custom_call.1} parent=11 // pred_region
          _
        $region24: #{tpu_custom_call.1} parent=11 // pred_fallthru
          _
        // Predicated region
        $region25: #{tpu_custom_call.1} parent=11 // pred_check
          %p205 = pneg %p112
        $region26: #{tpu_custom_call.1} parent=11 // pred_check_branch
          %207 = sbr.rel (%p205) target = $region28
        $region27: #{tpu_custom_call.1} parent=11 // pred_region
          %s209 = ssub.s32 1024, 1024
          %210 = vsyncadd [#allocation7], %s209
          %s211 = sshll.u32 [#allocation8], 4
          %s212 = int_to_ptr.vmem [resolvable:$true] %s211
          %217 = dma.hbm_to_vmem [thread:$0]  %s3, 1024, %s212, [#allocation7], 64, 64, 4
        $region28: #{tpu_custom_call.1} parent=11 // pred_fallthru
          _
        // Predicated region
        $region29: #{tpu_custom_call.1} parent=11 // pred_check
          %p218 = pneg %p133
        $region30: #{tpu_custom_call.1} parent=11 // pred_check_branch
          %220 = sbr.rel (%p218) target = $region32
        $region31: #{tpu_custom_call.1} parent=11 // pred_region
          _
        $region32: #{tpu_custom_call.1} parent=11 // pred_fallthru
          _
      $region12: #{tpu_custom_call.1} parent=5 // pred_fallthru
        _
      %p221 = scmp.lt.s32.totalorder %s16, 4
      // Predicated region
      $region33: #{tpu_custom_call.1} parent=5 // pred_check
        %p222 = pneg %p221
      $region34: #{tpu_custom_call.1} parent=5 // pred_check_branch
        %224 = sbr.rel (%p222) target = $region36
      $region35: #{tpu_custom_call.1} parent=5 // pred_region
        _
      $region36: #{tpu_custom_call.1} parent=5 // pred_fallthru
        _
      %p225 = scmp.le.s32.totalorder 1, %s16
      %p226 = scmp.lt.s32.totalorder %s16, 5
      %p227 = pnand %p225, %p226
      %p228 = pneg %p227
      // Predicated region
      $region37: #{tpu_custom_call.1} parent=5 // pred_check
        _
      $region38: #{tpu_custom_call.1} parent=5 // pred_check_branch
        %230 = sbr.rel (%p227) target = $region40
      $region39: #{tpu_custom_call.1} parent=5 // pred_region
        %s231 = ssub.s32 %s16, 1
        // Predicated region
        $region41: #{tpu_custom_call.1} parent=39 // pred_check
          %p232 = pneg %p49
        $region42: #{tpu_custom_call.1} parent=39 // pred_check_branch
          %234 = sbr.rel (%p232) target = $region44
        $region43: #{tpu_custom_call.1} parent=39 // pred_region
          %235 = dma.done [#allocation4], 512
        $region44: #{tpu_custom_call.1} parent=39 // pred_fallthru
          _
        // Predicated region
        $region45: #{tpu_custom_call.1} parent=39 // pred_check
          %p236 = pneg %p70
        $region46: #{tpu_custom_call.1} parent=39 // pred_check_branch
          %238 = sbr.rel (%p236) target = $region48
        $region47: #{tpu_custom_call.1} parent=39 // pred_region
          %239 = dma.done [#allocation7], 512
        $region48: #{tpu_custom_call.1} parent=39 // pred_fallthru
          _
        // Predicated region
        $region49: #{tpu_custom_call.1} parent=39 // pred_check
          %p240 = pneg %p112
        $region50: #{tpu_custom_call.1} parent=39 // pred_check_branch
          %242 = sbr.rel (%p240) target = $region52
        $region51: #{tpu_custom_call.1} parent=39 // pred_region
          %243 = dma.done [#allocation7], 1024
        $region52: #{tpu_custom_call.1} parent=39 // pred_fallthru
          _
        %p244 = pneg %p49
        %p245 = pneg %p46
        %p246 = pneg %p70
        %p247 = pneg %p67
        %p248 = pneg %p91
        %p249 = pneg %p88
        %p250 = pneg %p112
        %p251 = pneg %p109
        %p252 = pneg %p133
        %p253 = pneg %p130
        %p254 = pneg %p161
        %p255 = pneg %p158
        %s256 = sand.u32 %s148, 1
        %s257 = scalar_lea.sflag [#allocation5], %s256
        %s258 = sand.u32 %s148, 1
        %s259 = smul.addr %s258, 32
        %s260 = scalar_lea.vmem [#allocation9], %s259
        %s261 = smul.u32 %s26, %s25
        %s262 = smul.u32 4, %s261
        %s264 = smul.u32 %s26, 32
        %s265 = sshra.s32 %s264, 3
        %s266 = sand.u32 %s264, 7
        %s267 = smul.addr %s265, 4
        %s268 = scalar_lea.vmem [#allocation3], %s267
        %v269 = vld [vmem:[%s268] sm:$0xf]
        %v270 = vld [vmem:[%s268 + $0x4] sm:$0xf]
        %v271 = vld [vmem:[%s268 + $0x8] sm:$0xf]
        %v272 = vld [vmem:[%s268 + $0xc] sm:$0xf]
        %p273 = scmp.eq.s32.totalorder %s25, 0
        // Predicated region
        $region53: #{tpu_custom_call.1} parent=39 // pred_check
          %p274 = pneg %p273
        $region54: #{tpu_custom_call.1} parent=39 // pred_check_branch
          %276 = sbr.rel (%p274) target = $region56
        $region55: #{tpu_custom_call.1} parent=39 // pred_region
          %v277 = vld [vmem:[#allocation6] sm:$0xf]
          %v278 = vld [vmem:[#allocation6 + $0x4] sm:$0xf]
          %v279 = vld [vmem:[#allocation6 + $0x8] sm:$0xf]
          %v280 = vld [vmem:[#allocation6 + $0xc] sm:$0xf]
          %v281 = vld [vmem:[#allocation6 + $0x10] sm:$0xf]
          %v282 = vld [vmem:[#allocation6 + $0x14] sm:$0xf]
          %v283 = vld [vmem:[#allocation6 + $0x18] sm:$0xf]
          %v284 = vld [vmem:[#allocation6 + $0x1c] sm:$0xf]
          %v285 = vld [vmem:[%s2] sm:$0x1]
          %v287 = vlaneseq
          %v288 = vshrl.u32 %v287, 7
          %v289 = vsub.s32 0, %v288
          %v290 = vrot.slane %v285, %v289
          %v296 = vunpack.c.l.b16 %v269
          %v297 = vunpack.c.l.b16 %v270
          %v298 = vunpack.c.l.b16 %v271
          %v299 = vunpack.c.l.b16 %v272
          %v300 = vpack.c.b16 %v297, %v296
          %v301 = vpack.c.b16 %v299, %v298
          %v310 = vunpack.c.l.b16 %v277
          %v311 = vunpack.c.l.b16 %v278
          %v312 = vunpack.c.l.b16 %v279
          %v313 = vunpack.c.l.b16 %v280
          %v314 = vunpack.c.l.b16 %v281
          %v315 = vunpack.c.l.b16 %v282
          %v316 = vunpack.c.l.b16 %v283
          %v317 = vunpack.c.l.b16 %v284
          %v318 = vpack.c.b16 %v311, %v310
          %v319 = vpack.c.b16 %v313, %v312
          %v320 = vpack.c.b16 %v315, %v314
          %v321 = vpack.c.b16 %v317, %v316
          %vm326 = vcmask 523264
          %v328 = vsel %vm326, %v300, 0
          %v331 = vsel %vm326, %v301, 0
          %333 = vmatprep.subr.bf16.mxu0 0
          %334 = vmatpush1.bf16.msra.mxu0 %v318
          %335 = vmatprep.subr.bf16.mxu0 0
          %336 = vmatpush1.bf16.msra.mxu0 %v319
          %337 = vmatprep.subr.bf16.mxu0 0
          %338 = vmatpush1.bf16.msra.mxu0 %v320
          %339 = vmatprep.subr.bf16.mxu0 0
          %340 = vmatpush1.bf16.msra.mxu0 %v321
          %341 = vmatprep.subr.bf16.mxu0 0
          %342 = vmatpush1.bf16.msra.mxu0 0
          %343 = vmatprep.subr.bf16.mxu0 0
          %344 = vmatpush1.bf16.msra.mxu0 0
          %345 = vmatprep.subr.bf16.mxu0 0
          %346 = vmatpush1.bf16.msra.mxu0 0
          %347 = vmatprep.subr.bf16.mxu0 0
          %348 = vmatpush1.bf16.msra.mxu0 0
          %349 = vmatprep.subr.bf16.mxu0 0
          %350 = vmatpush1.bf16.msra.mxu0 0
          %351 = vmatprep.subr.bf16.mxu0 0
          %352 = vmatpush1.bf16.msra.mxu0 0
          %353 = vmatprep.subr.bf16.mxu0 0
          %354 = vmatpush1.bf16.msra.mxu0 0
          %355 = vmatprep.subr.bf16.mxu0 0
          %356 = vmatpush1.bf16.msra.mxu0 0
          %357 = vmatprep.subr.bf16.mxu0 0
          %358 = vmatpush1.bf16.msra.mxu0 0
          %359 = vmatprep.subr.bf16.mxu0 0
          %360 = vmatpush1.bf16.msra.mxu0 0
          %361 = vmatprep.subr.bf16.mxu0 0
          %362 = vmatpush1.bf16.msra.mxu0 0
          %363 = vmatprep.subr.bf16.mxu0 0
          %364 = vmatpush1.bf16.msra.mxu0 0
          %365 = vmatprep.mubr.bf16.mxu0 0
          %366 = vmatmul.mubr.bf16.gmra.mrb[0].mxu0 %v328
          %v367 = vpop.f32.mrb[0].mxu0
          %v368 = vadd.f32 %v290, %v367
          %v369 = vpop.f32.mrb[0].mxu0
          %v370 = vpop.f32.mrb[0].mxu0
          %v371 = vadd.f32 %v290, %v370
          %v372 = vpop.f32.mrb[0].mxu0
          %373 = vmatprep.mubr.bf16.mxu0 0
          %374 = vmatmul.mubr.bf16.gmra.mrb[0].mxu0 %v331
          %v375 = vpop.f32.mrb[0].mxu0
          %v376 = vadd.f32 %v290, %v375
          %v377 = vpop.f32.mrb[0].mxu0
          %v378 = vpop.f32.mrb[0].mxu0
          %v379 = vadd.f32 %v290, %v378
          %v380 = vpop.f32.mrb[0].mxu0
          %381 = vdwg.mxu0
          %v382 = vmax.f32 %v368, 0.0
          %v383 = vmax.f32 %v371, 0.0
          %v384 = vmax.f32 %v376, 0.0
          %v385 = vmax.f32 %v379, 0.0
          %v386 = vpack.c.bf16 %v383, %v382
          %v387 = vpack.c.bf16 %v385, %v384
          %s388 = sshra.s32 %s264, 4
          %s389 = sand.u32 %s264, 15
          %s390 = smul.addr %s388, 8
          %s391 = scalar_lea.vmem [#allocation2], %s390
          %392 = vst [vmem:[%s391] sm:$0xff] %v386
          %393 = vst [vmem:[%s391 + $0x8] sm:$0xff] %v387
        $region56: #{tpu_custom_call.1} parent=39 // pred_fallthru
          _
        %p394 = scmp.eq.s32.totalorder %s25, 1
        // Predicated region
        $region57: #{tpu_custom_call.1} parent=39 // pred_check
          %p395 = pneg %p394
        $region58: #{tpu_custom_call.1} parent=39 // pred_check_branch
          %397 = sbr.rel (%p395) target = $region60
        $region59: #{tpu_custom_call.1} parent=39 // pred_region
          %v398 = vld [vmem:[#allocation2] sm:$0xff]
          %v399 = vld [vmem:[#allocation2 + $0x8] sm:$0xff]
          %v400 = vld [vmem:[#allocation2 + $0x10] sm:$0xff]
          %v401 = vld [vmem:[#allocation2 + $0x18] sm:$0xff]
          %v406 = vunpack.c.l.b16 %v269
          %v407 = vunpack.c.l.b16 %v270
          %v408 = vunpack.c.l.b16 %v271
          %v409 = vunpack.c.l.b16 %v272
          %v410 = vpack.c.b16 %v407, %v406
          %v411 = vpack.c.b16 %v409, %v408
          %vm412 = vcmask 523264
          %v414 = vsel %vm412, %v410, 0
          %v417 = vsel %vm412, %v411, 0
          %419 = vmatprep.subr.bf16.mxu0 0
          %420 = vmatpush1.bf16.msra.mxu0 %v398
          %421 = vmatprep.subr.bf16.mxu0 0
          %422 = vmatpush1.bf16.msra.mxu0 %v399
          %423 = vmatprep.subr.bf16.mxu0 0
          %424 = vmatpush1.bf16.msra.mxu0 %v400
          %425 = vmatprep.subr.bf16.mxu0 0
          %426 = vmatpush1.bf16.msra.mxu0 %v401
          %427 = vmatprep.subr.bf16.mxu0 0
          %428 = vmatpush1.bf16.msra.mxu0 0
          %429 = vmatprep.subr.bf16.mxu0 0
          %430 = vmatpush1.bf16.msra.mxu0 0
          %431 = vmatprep.subr.bf16.mxu0 0
          %432 = vmatpush1.bf16.msra.mxu0 0
          %433 = vmatprep.subr.bf16.mxu0 0
          %434 = vmatpush1.bf16.msra.mxu0 0
          %435 = vmatprep.subr.bf16.mxu0 0
          %436 = vmatpush1.bf16.msra.mxu0 0
          %437 = vmatprep.subr.bf16.mxu0 0
          %438 = vmatpush1.bf16.msra.mxu0 0
          %439 = vmatprep.subr.bf16.mxu0 0
          %440 = vmatpush1.bf16.msra.mxu0 0
          %441 = vmatprep.subr.bf16.mxu0 0
          %442 = vmatpush1.bf16.msra.mxu0 0
          %443 = vmatprep.subr.bf16.mxu0 0
          %444 = vmatpush1.bf16.msra.mxu0 0
          %445 = vmatprep.subr.bf16.mxu0 0
          %446 = vmatpush1.bf16.msra.mxu0 0
          %447 = vmatprep.subr.bf16.mxu0 0
          %448 = vmatpush1.bf16.msra.mxu0 0
          %449 = vmatprep.subr.bf16.mxu0 0
          %450 = vmatpush1.bf16.msra.mxu0 0
          %451 = vmatprep.mubr.bf16.mxu0 0
          %452 = vmatmul.mubr.bf16.gmra.mrb[0].mxu0 %v414
          %v453 = vpop.f32.mrb[0].mxu0
          %v454 = vadd.f32 0.0, %v453
          %v455 = vpop.f32.mrb[0].mxu0
          %v456 = vpop.f32.mrb[0].mxu0
          %v457 = vadd.f32 0.0, %v456
          %v458 = vpop.f32.mrb[0].mxu0
          %459 = vmatprep.mubr.bf16.mxu0 0
          %460 = vmatmul.mubr.bf16.gmra.mrb[0].mxu0 %v417
          %v461 = vpop.f32.mrb[0].mxu0
          %v462 = vadd.f32 0.0, %v461
          %v463 = vpop.f32.mrb[0].mxu0
          %v464 = vpop.f32.mrb[0].mxu0
          %v465 = vadd.f32 0.0, %v464
          %v466 = vpop.f32.mrb[0].mxu0
          %467 = vdwg.mxu0
          %v468 = vpack.c.bf16 %v457, %v454
          %v469 = vpack.c.bf16 %v465, %v462
          %v470 = vld [vmem:[#allocation8] sm:$0xf]
          %v471 = vld [vmem:[#allocation8 + $0x4] sm:$0xf]
          %v472 = vld [vmem:[#allocation8 + $0x8] sm:$0xf]
          %v473 = vld [vmem:[#allocation8 + $0xc] sm:$0xf]
          %v474 = vld [vmem:[#allocation8 + $0x10] sm:$0xf]
          %v475 = vld [vmem:[#allocation8 + $0x14] sm:$0xf]
          %v476 = vld [vmem:[#allocation8 + $0x18] sm:$0xf]
          %v477 = vld [vmem:[#allocation8 + $0x1c] sm:$0xf]
          %v478 = vld [vmem:[#allocation8 + $0x20] sm:$0xf]
          %v479 = vld [vmem:[#allocation8 + $0x24] sm:$0xf]
          %v480 = vld [vmem:[#allocation8 + $0x28] sm:$0xf]
          %v481 = vld [vmem:[#allocation8 + $0x2c] sm:$0xf]
          %v482 = vld [vmem:[#allocation8 + $0x30] sm:$0xf]
          %v483 = vld [vmem:[#allocation8 + $0x34] sm:$0xf]
          %v484 = vld [vmem:[#allocation8 + $0x38] sm:$0xf]
          %v485 = vld [vmem:[#allocation8 + $0x3c] sm:$0xf]
          %v486 = vld [vmem:[%s4] sm:$0x1]
          %v488 = vlaneseq
          %v489 = vshrl.u32 %v488, 7
          %v490 = vsub.s32 0, %v489
          %v491 = vrot.slane %v486, %v490
          %v509 = vunpack.c.l.b16 %v470
          %v510 = vunpack.c.l.b16 %v471
          %v511 = vunpack.c.l.b16 %v472
          %v512 = vunpack.c.l.b16 %v473
          %v513 = vunpack.c.l.b16 %v474
          %v514 = vunpack.c.l.b16 %v475
          %v515 = vunpack.c.l.b16 %v476
          %v516 = vunpack.c.l.b16 %v477
          %v517 = vunpack.c.l.b16 %v478
          %v518 = vunpack.c.l.b16 %v479
          %v519 = vunpack.c.l.b16 %v480
          %v520 = vunpack.c.l.b16 %v481
          %v521 = vunpack.c.l.b16 %v482
          %v522 = vunpack.c.l.b16 %v483
          %v523 = vunpack.c.l.b16 %v484
          %v524 = vunpack.c.l.b16 %v485
          %v525 = vpack.c.b16 %v510, %v509
          %v526 = vpack.c.b16 %v512, %v511
          %v527 = vpack.c.b16 %v514, %v513
          %v528 = vpack.c.b16 %v516, %v515
          %v529 = vpack.c.b16 %v518, %v517
          %v530 = vpack.c.b16 %v520, %v519
          %v531 = vpack.c.b16 %v522, %v521
          %v532 = vpack.c.b16 %v524, %v523
          %541 = vmatprep.subr.bf16.mxu0 0
          %542 = vmatpush1.bf16.msra.mxu0 %v525
          %543 = vmatprep.subr.bf16.mxu0 0
          %544 = vmatpush1.bf16.msra.mxu0 %v526
          %545 = vmatprep.subr.bf16.mxu0 0
          %546 = vmatpush1.bf16.msra.mxu0 %v527
          %547 = vmatprep.subr.bf16.mxu0 0
          %548 = vmatpush1.bf16.msra.mxu0 %v528
          %549 = vmatprep.subr.bf16.mxu0 0
          %550 = vmatpush1.bf16.msra.mxu0 %v529
          %551 = vmatprep.subr.bf16.mxu0 0
          %552 = vmatpush1.bf16.msra.mxu0 %v530
          %553 = vmatprep.subr.bf16.mxu0 0
          %554 = vmatpush1.bf16.msra.mxu0 %v531
          %555 = vmatprep.subr.bf16.mxu0 0
          %556 = vmatpush1.bf16.msra.mxu0 %v532
          %557 = vmatprep.subr.bf16.mxu0 0
          %558 = vmatpush1.bf16.msra.mxu0 0
          %559 = vmatprep.subr.bf16.mxu0 0
          %560 = vmatpush1.bf16.msra.mxu0 0
          %561 = vmatprep.subr.bf16.mxu0 0
          %562 = vmatpush1.bf16.msra.mxu0 0
          %563 = vmatprep.subr.bf16.mxu0 0
          %564 = vmatpush1.bf16.msra.mxu0 0
          %565 = vmatprep.subr.bf16.mxu0 0
          %566 = vmatpush1.bf16.msra.mxu0 0
          %567 = vmatprep.subr.bf16.mxu0 0
          %568 = vmatpush1.bf16.msra.mxu0 0
          %569 = vmatprep.subr.bf16.mxu0 0
          %570 = vmatpush1.bf16.msra.mxu0 0
          %571 = vmatprep.subr.bf16.mxu0 0
          %572 = vmatpush1.bf16.msra.mxu0 0
          %573 = vmatprep.mubr.bf16.mxu0 0
          %574 = vmatmul.mubr.bf16.gmra.mrb[0].mxu0 %v468
          %v575 = vpop.f32.mrb[0].mxu0
          %v576 = vadd.f32 %v491, %v575
          %v577 = vpop.f32.mrb[0].mxu0
          %v578 = vpop.f32.mrb[0].mxu0
          %v579 = vadd.f32 %v491, %v578
          %v580 = vpop.f32.mrb[0].mxu0
          %581 = vmatprep.mubr.bf16.mxu0 0
          %582 = vmatmul.mubr.bf16.gmra.mrb[0].mxu0 %v469
          %v583 = vpop.f32.mrb[0].mxu0
          %v584 = vadd.f32 %v491, %v583
          %v585 = vpop.f32.mrb[0].mxu0
          %v586 = vpop.f32.mrb[0].mxu0
          %v587 = vadd.f32 %v491, %v586
          %v588 = vpop.f32.mrb[0].mxu0
          %589 = vdwg.mxu0
          %590 = vst [vmem:[%s260] sm:$0xff] %v576
          %591 = vst [vmem:[%s260 + $0x8] sm:$0xff] %v579
          %592 = vst [vmem:[%s260 + $0x10] sm:$0xff] %v584
          %593 = vst [vmem:[%s260 + $0x18] sm:$0xff] %v587
        $region60: #{tpu_custom_call.1} parent=39 // pred_fallthru
          _
        %s594 = sand.u32 %s148, 1
        %s595 = scalar_lea.sflag [#allocation5], %s594
        %s596 = sand.u32 %s148, 1
        %s597 = smul.addr %s596, 32
        %s598 = scalar_lea.vmem [#allocation9], %s597
        // Predicated region
        $region61: #{tpu_custom_call.1} parent=39 // pred_check
          %p599 = pneg %p158
        $region62: #{tpu_custom_call.1} parent=39 // pred_check_branch
          %601 = sbr.rel (%p599) target = $region64
        $region63: #{tpu_custom_call.1} parent=39 // pred_region
          %s602 = smul.u32 %s26, %s25
          %s603 = smul.u32 4, %s602
          %s605 = ssub.s32 512, 512
          %606 = vsyncadd %s595, %s605
          %s607 = smul.addr %s603, 128
          %s608 = scalar_lea.hbm %s5, %s607
          %s609 = sshll.u32 %s598, 4
          %s610 = int_to_ptr.vmem [resolvable:$true] %s609
          %615 = dma.vmem_to_hbm [thread:$0]  %s610, 512, %s608, %s595, 128, 128, 8
        $region64: #{tpu_custom_call.1} parent=39 // pred_fallthru
          _
      $region40: #{tpu_custom_call.1} parent=5 // pred_fallthru
        _
      %p616 = scmp.le.s32.totalorder 2, %s16
      // Predicated region
      $region65: #{tpu_custom_call.1} parent=5 // pred_check
        %p617 = pneg %p616
      $region66: #{tpu_custom_call.1} parent=5 // pred_check_branch
        %619 = sbr.rel (%p617) target = $region68
      $region67: #{tpu_custom_call.1} parent=5 // pred_region
        %s620 = ssub.s32 %s16, 2
        // Predicated region
        $region69: #{tpu_custom_call.1} parent=67 // pred_check
          %p621 = pneg %p164
        $region70: #{tpu_custom_call.1} parent=67 // pred_check_branch
          %623 = sbr.rel (%p621) target = $region72
        $region71: #{tpu_custom_call.1} parent=67 // pred_region
          %s624 = sand.u32 %s149, 1
          %s625 = scalar_lea.sflag [#allocation5], %s624
          %s626 = sand.u32 %s149, 1
          %s627 = smul.addr %s626, 32
          %s628 = scalar_lea.vmem [#allocation9], %s627
          %629 = dma.done %s625, 512
        $region72: #{tpu_custom_call.1} parent=67 // pred_fallthru
          _
      $region68: #{tpu_custom_call.1} parent=5 // pred_fallthru
        _
    $region6: #{tpu_custom_call.1} parent=1 // loop_footer
      %s20 = sadd.s32 1, %s16
    $region7: #{tpu_custom_call.1} parent=1 // loop_footer_branch
      %15 = sbr.rel target = $region3
    $region8: #{tpu_custom_call.1} parent=1 // loop_exit
      _
    %630 = vsyncpa [#allocation4], 1
    %s631 = scalar_lea.sflag [#allocation4], 1
    %632 = vsyncpa %s631, 1
    %633 = vsyncpa [#allocation7], 1
    %634 = vsyncpa [#allocation5], 1
    %s635 = scalar_lea.sflag [#allocation5], 1
    %636 = vsyncpa %s635, 1

</llo_original>
